<compile_context>
chip_gen: v7x
topology: tpu7x:2x2x1
jax: 0.10.0
libtpu: 0.0.40
codegen_flags: <defaults>
</compile_context>

<pallas_src>
from functools import partial

import jax
import jax.numpy as jnp
from jax.experimental import pallas as pl
from jax.experimental.pallas import tpu as pltpu


def _round_up(x: int, m: int) -> int:
    return ((x + m - 1) // m) * m


def _pick_tile(n: int, target: int) -> int:
    """Largest power-of-two tile <= target that divides n (n is pre-padded)."""
    if n <= target:
        return n
    t = 1
    while t * 2 <= target:
        t *= 2
    while t >= 8:
        if n % t == 0:
            return t
        t //= 2
    return n


def _attention_base_kernel(q_ref, k_ref, v_ref, tok_ref, wo_ref, g_ref, o_ref,
                           m_scr, l_scr, acc_scr, *,
                           eps, use_null_tokens, out_valid, n_real, tk, mask_kv):
    # grid = (batch, q_tiles, kv_tiles); kv (reduction) axis is innermost.
    ki = pl.program_id(2)
    k_last = pl.num_programs(2) - 1

    q = q_ref[0]                                     # (h, tq, d), pre-scaled, MXU dtype

    # ---- per-(batch, q-tile) online-softmax init; absorbs the null k/v token ----
    @pl.when(ki == 0)
    def _():
        if use_null_tokens:
            nk = tok_ref[0:1, :].astype(jnp.float32)                 # (1, d)
            nv = tok_ref[1:2, :].astype(jnp.float32)                 # (1, d)
            s0 = jnp.sum(q.astype(jnp.float32) * nk[None], axis=-1,
                         keepdims=True)                              # (h, tq, 1)
            m_scr[...] = s0
            l_scr[...] = jnp.ones_like(s0)                           # exp(s0 - s0) = 1
            acc_scr[...] = jnp.broadcast_to(nv[None], acc_scr.shape)
        else:
            m_scr[...] = jnp.full_like(m_scr, -jnp.inf)
            l_scr[...] = jnp.zeros_like(l_scr)
            acc_scr[...] = jnp.zeros_like(acc_scr)

    # ---- online-softmax update for this K/V tile (all heads, fp32 stats) ----
    k = k_ref[0]                                     # (h, tk, d)
    v = v_ref[0]                                     # (h, tk, d)
    s = jnp.einsum('hqd,hkd->hqk', q, k,
                   preferred_element_type=jnp.float32)               # (h, tq, tk)
    if mask_kv:
        # Mask padded key columns (static flag; only the last kv tile has them).
        col = jax.lax.broadcasted_iota(jnp.int32, s.shape, 2) + ki * tk
        s = jnp.where(col < n_real, s, jnp.finfo(jnp.float32).min)

    m_prev = m_scr[...]
    m_new = jnp.maximum(m_prev, jnp.max(s, axis=-1, keepdims=True))
    alpha = jnp.exp(m_prev - m_new)
    p = jnp.exp(s - m_new)                                           # fp32 probabilities
    l_scr[...] = alpha * l_scr[...] + jnp.sum(p, axis=-1, keepdims=True)
    acc_scr[...] = alpha * acc_scr[...] + jnp.einsum(
        'hqk,hkd->hqd', p.astype(v.dtype), v,
        preferred_element_type=jnp.float32)
    m_scr[...] = m_new

    # ---- finalize: merge heads, one wide projection, fused bias-free LayerNorm ----
    @pl.when(ki == k_last)
    def _():
        inv_l = pl.reciprocal(l_scr[...], approx=False)   # exact; once per q-tile
        out_h = acc_scr[...] * inv_l                      # (h, tq, d) fp32
        h = out_h.shape[0]
        merged = jnp.concatenate([out_h[i] for i in range(h)], axis=-1)  # (tq, h*d)
        y = jnp.dot(merged.astype(wo_ref.dtype), wo_ref[...],
                    preferred_element_type=jnp.float32)   # (tq, out_pad), lane-dense
        # Bias-free LayerNorm over the real out_features; padded w_out columns are
        # zero, so E[y] / E[y^2] over the real count reproduce the biased variance.
        inv_f = 1.0 / out_valid
        mean = jnp.sum(y, axis=-1, keepdims=True) * inv_f
        var = jnp.sum(y * y, axis=-1, keepdims=True) * inv_f - mean * mean
        yn = (y - mean) * jax.lax.rsqrt(var + eps) * g_ref[...]
        o_ref[0] = yn.astype(o_ref.dtype)


def attention_base_pallas(q, k, v, params, *, num_heads, head_features,
                          use_null_tokens=True, eps=1e-5,
                          q_tile_target=128, k_tile_target=256,
                          mxu_dtype=jnp.bfloat16):
    """q, k, v: (b, n, num_heads*head_features) -> (b, n, out_features)."""
    tokens, w_out, g_out = params
    b, n, mid = q.shape
    h, d = num_heads, head_features
    assert mid == h * d
    out_features = w_out.shape[0]
    assert w_out.shape == (out_features, mid)
    assert tokens.shape == (2, d)
    out_dtype = q.dtype
    cdt = jnp.dtype(mxu_dtype)                       # MXU operand dtype (bf16-native)

    # ---- tiling: pad n to a multiple of 128 (8 for short seqs) -> no 8-wide cliffs
    n_pad = _round_up(n, 128) if n >= 128 else _round_up(n, 8)
    tq = _pick_tile(n_pad, q_tile_target)
    tk = _pick_tile(n_pad, k_tile_target)
    assert n_pad % tq == 0 and n_pad % tk == 0
    nq, nkt = n_pad // tq, n_pad // tk
    mask_kv = n_pad != n
    out_pad = _round_up(out_features, 128)           # lane-dense output / projection

    scale = d ** (-0.5)

    # ---- wrapper-side layout prep (one fused pass: split heads + scale q + cast) ----
    def prep(t, s=None):                             # 'b n (h d) -> b h n_pad d'
        t = t.reshape(b, n, h, d).transpose(0, 2, 1, 3)
        if s is not None:
            t = t * s                                # q scaling hoisted out of the kernel
        t = t.astype(cdt)
        if n_pad != n:
            t = jnp.pad(t, ((0, 0), (0, 0), (0, n_pad - n), (0, 0)))
        return t

    q4, k4, v4 = prep(q, scale), prep(k), prep(v)
    # y = merged('b n (h d)') @ w_out.T  ->  keep w_out fully resident as (h*d, out_pad)
    wo = jnp.pad(w_out.T.astype(cdt), ((0, 0), (0, out_pad - out_features)))
    g2 = jnp.pad(g_out.astype(jnp.float32),
                 (0, out_pad - out_features)).reshape(1, out_pad)
    tok = tokens.astype(jnp.float32)

    # ---- VMEM budget from actual tile sizes; query the chip instead of hardcoding ----
    cb, ob = cdt.itemsize, jnp.dtype(out_dtype).itemsize
    vmem_need = (
        2 * (h * tq * d + 2 * h * tk * d) * cb           # double-buffered q/k/v blocks
        + 2 * (2 * d * 4 + h * d * out_pad * cb + out_pad * 4)  # tokens, w_out, g
        + 2 * tq * out_pad * ob                           # output block
        + h * tq * (d + 2) * 4                            # m/l/acc scratch
        + (2 * h * tq * tk + tq * (h * d + 2 * out_pad)) * 4  # fp32 s/p/merged/y temps
    )
    try:
        vmem_cap = pltpu.get_tpu_info().vmem_capacity_bytes   # 64 MiB on v7x, 128 MiB v5e/v6e
    except Exception:
        vmem_cap = 64 * 2 ** 20
    vmem_limit = int(min(int(0.8 * vmem_cap), max(32 * 2 ** 20, 2 * vmem_need)))

    n_keys = n + (1 if use_null_tokens else 0)
    cost = pl.CostEstimate(
        flops=int(4 * b * h * n * n_keys * d + 2 * b * n * mid * out_features),
        transcendentals=int(b * h * n * n_keys),
        bytes_accessed=int(cb * (3 * b * n_pad * mid + mid * out_pad)
                           + ob * b * n_pad * out_pad
                           + 4 * (2 * d + out_pad)),
    )

    kernel = partial(_attention_base_kernel,
                     eps=eps, use_null_tokens=use_null_tokens,
                     out_valid=float(out_features), n_real=n, tk=tk, mask_kv=mask_kv)

    out = pl.pallas_call(
        kernel,
        out_shape=jax.ShapeDtypeStruct((b, n_pad, out_pad), out_dtype),
        grid_spec=pltpu.PrefetchScalarGridSpec(
            num_scalar_prefetch=0,
            grid=(b, nq, nkt),
            in_specs=[
                pl.BlockSpec((1, h, tq, d), lambda bi, qi, ki: (bi, 0, qi, 0)),  # q
                pl.BlockSpec((1, h, tk, d), lambda bi, qi, ki: (bi, 0, ki, 0)),  # k
                pl.BlockSpec((1, h, tk, d), lambda bi, qi, ki: (bi, 0, ki, 0)),  # v
                pl.BlockSpec((2, d), lambda bi, qi, ki: (0, 0)),                 # null tokens
                pl.BlockSpec((h * d, out_pad), lambda bi, qi, ki: (0, 0)),       # w_out (resident)
                pl.BlockSpec((1, out_pad), lambda bi, qi, ki: (0, 0)),           # to_out[1].g
            ],
            out_specs=pl.BlockSpec((1, tq, out_pad), lambda bi, qi, ki: (bi, qi, 0)),
            scratch_shapes=[
                pltpu.VMEM((h, tq, 1), jnp.float32),    # running max m
                pltpu.VMEM((h, tq, 1), jnp.float32),    # running denom l
                pltpu.VMEM((h, tq, d), jnp.float32),    # attn@v accumulator (all heads)
            ],
        ),
        compiler_params=pltpu.CompilerParams(
            dimension_semantics=("parallel", "parallel", "arbitrary"),
            vmem_limit_bytes=vmem_limit,
        ),
        cost_estimate=cost,
    )(q4, k4, v4, tok, wo, g2)

    return out[:, :n, :out_features]


def attention_base_reference(q, k, v, params, *, num_heads, head_features,
                             use_null_tokens=True, eps=1e-5):
    """Pure-JAX fp32 reference reproducing the PyTorch AttentionBase semantics."""
    tokens, w_out, g_out = params
    b, n, mid = q.shape
    h, d = num_heads, head_features
    hp = jax.lax.Precision.HIGHEST

    def split(t):
        return t.reshape(b, n, h, d).transpose(0, 2, 1, 3).astype(jnp.float32)

    qh = split(q) * (d ** -0.5)
    kh = split(k)
    vh = split(v)
    if use_null_tokens:
        nk = jnp.broadcast_to(tokens[0].astype(jnp.float32), (b, h, 1, d))
        nv = jnp.broadcast_to(tokens[1].astype(jnp.float32), (b, h, 1, d))
        kh = jnp.concatenate([nk, kh], axis=2)
        vh = jnp.concatenate([nv, vh], axis=2)
    sim = jnp.einsum('bhnd,bhmd->bhnm', qh, kh, precision=hp)
    attn = jax.nn.softmax(sim, axis=-1)
    out = jnp.einsum('bhnm,bhmd->bhnd', attn, vh, precision=hp)
    out = out.transpose(0, 2, 1, 3).reshape(b, n, mid)
    y = jnp.einsum('bnf,of->bno', out, w_out.astype(jnp.float32), precision=hp)
    mean = jnp.mean(y, axis=-1, keepdims=True)
    var = jnp.mean((y - mean) ** 2, axis=-1, keepdims=True)
    return ((y - mean) * jax.lax.rsqrt(var + eps) * g_out.astype(jnp.float32)
            ).astype(q.dtype)


if __name__ == "__main__":
    # AttentionBase(features=32, head_features=16, num_heads=2) -> out_features=32.
    batch = 2
    head_features, num_heads = 16, 2
    mid = head_features * num_heads          # 32
    out_features = 32                        # default out_features = features

    keys = jax.random.split(jax.random.PRNGKey(0), 12)
    tokens = jax.random.normal(keys[0], (2, head_features), dtype=jnp.float32)
    w_out = 0.1 * jax.random.normal(keys[1], (out_features, mid), dtype=jnp.float32)
    g_out = jnp.ones((out_features,), dtype=jnp.float32)
    params = (tokens, w_out, g_out)

    # Tolerance: the kernel uses bf16 MXU operands (fp32 accumulation) per the
    # perf guidance, and the final LayerNorm output has ~unit variance, so bf16
    # operand rounding shows up as a few-percent worst-case absolute error vs
    # the HIGHEST-precision fp32 reference.
    TOL = 8e-2

    def run_case(seq, kidx, **tile_kw):
        q = jax.random.normal(keys[kidx + 0], (batch, seq, mid), dtype=jnp.float32)
        k = jax.random.normal(keys[kidx + 1], (batch, seq, mid), dtype=jnp.float32)
        v = jax.random.normal(keys[kidx + 2], (batch, seq, mid), dtype=jnp.float32)
        y = attention_base_pallas(q, k, v, params, num_heads=num_heads,
                                  head_features=head_features,
                                  use_null_tokens=True, **tile_kw)
        y = jax.block_until_ready(y)
        y_ref = attention_base_reference(q, k, v, params, num_heads=num_heads,
                                         head_features=head_features,
                                         use_null_tokens=True)
        assert y.shape == (batch, seq, out_features), y.shape
        err = float(jnp.max(jnp.abs(y.astype(jnp.float32) - y_ref.astype(jnp.float32))))
        assert err < TOL, f"seq={seq}: mismatch vs reference: max|diff|={err}"
        return err

    run_case(8, 2)                                          # single-tile path (n=8)
    run_case(128, 5, q_tile_target=64, k_tile_target=64)    # multi q/kv tiles (online softmax)
    run_case(36, 8)                                         # padded n -> K-column masking path
    print("KERNEL_OK")
</pallas_src>

<mosaic_0001>
module attributes {stable_mosaic.version = 11 : i64} {
  func.func @_attention_base_kernel(%arg0: i32, %arg1: i32, %arg2: i32, %arg3: memref<1x2x8x16xbf16, #tpu.memory_space<vmem>>, %arg4: memref<1x2x8x16xbf16, #tpu.memory_space<vmem>>, %arg5: memref<1x2x8x16xbf16, #tpu.memory_space<vmem>>, %arg6: memref<2x16xf32, #tpu.memory_space<vmem>>, %arg7: memref<32x128xbf16, #tpu.memory_space<vmem>>, %arg8: memref<1x128xf32, #tpu.memory_space<vmem>>, %arg9: memref<1x8x128xf32, #tpu.memory_space<vmem>>, %arg10: memref<2x8x1xf32, #tpu.memory_space<vmem>>, %arg11: memref<2x8x1xf32, #tpu.memory_space<vmem>>, %arg12: memref<2x8x16xf32, #tpu.memory_space<vmem>>) attributes {dimension_semantics = [#tpu.dimension_semantics<parallel>, #tpu.dimension_semantics<parallel>, #tpu.dimension_semantics<arbitrary>], iteration_bounds = array<i64: 2, 1, 1>, scalar_prefetch = 0 : i64, scratch_operands = 3 : i64, tpu.core_type = #tpu.core_type<tc>, window_params = [{transform_indices = @transform_0, window_bounds = array<i64: 1, 2, 8, 16>}, {transform_indices = @transform_1, window_bounds = array<i64: 1, 2, 8, 16>}, {transform_indices = @transform_2, window_bounds = array<i64: 1, 2, 8, 16>}, {pipeline_mode = #tpu.pipeline_mode<synchronous>, transform_indices = @transform_3, window_bounds = array<i64: 2, 16>}, {pipeline_mode = #tpu.pipeline_mode<synchronous>, transform_indices = @transform_4, window_bounds = array<i64: 32, 128>}, {pipeline_mode = #tpu.pipeline_mode<synchronous>, transform_indices = @transform_5, window_bounds = array<i64: 1, 128>}, {transform_indices = @transform_6, window_bounds = array<i64: 1, 8, 128>}]} {
    %c0 = arith.constant 0 : index
    %c0_0 = arith.constant 0 : index
    %c0_1 = arith.constant 0 : index
    %c0_2 = arith.constant 0 : index
    %0 = vector.load %arg3[%c0, %c0_0, %c0_1, %c0_2] : memref<1x2x8x16xbf16, #tpu.memory_space<vmem>>, vector<1x2x8x16xbf16>
    %1 = vector.shape_cast %0 : vector<1x2x8x16xbf16> to vector<2x8x16xbf16>
    %c0_i32 = arith.constant 0 : i32
    %2 = arith.cmpi eq, %arg2, %c0_i32 : i32
    %3 = arith.extui %2 : i1 to i32
    %c0_i32_3 = arith.constant 0 : i32
    %4 = arith.cmpi ne, %3, %c0_i32_3 : i32
    scf.if %4 {
      %c0_35 = arith.constant 0 : index
      %c0_36 = arith.constant 0 : index
      %36 = vector.load %arg6[%c0_35, %c0_36] : memref<2x16xf32, #tpu.memory_space<vmem>>, vector<1x16xf32>
      %c1 = arith.constant 1 : index
      %c0_37 = arith.constant 0 : index
      %37 = vector.load %arg6[%c1, %c0_37] : memref<2x16xf32, #tpu.memory_space<vmem>>, vector<1x16xf32>
      %38 = arith.extf %1 : vector<2x8x16xbf16> to vector<2x8x16xf32>
      %39 = vector.shape_cast %36 : vector<1x16xf32> to vector<1x1x16xf32>
      %40 = vector.broadcast %39 : vector<1x1x16xf32> to vector<2x8x16xf32>
      %41 = arith.mulf %38, %40 : vector<2x8x16xf32>
      %cst_38 = arith.constant dense<0.000000e+00> : vector<2x8xf32>
      %42 = vector.multi_reduction <add>, %41, %cst_38 [2] : vector<2x8x16xf32> to vector<2x8xf32>
      %43 = vector.shape_cast %42 : vector<2x8xf32> to vector<2x8x1xf32>
      %c0_39 = arith.constant 0 : index
      %c0_40 = arith.constant 0 : index
      %c0_41 = arith.constant 0 : index
      %44 = vector.load %arg10[%c0_39, %c0_40, %c0_41] : memref<2x8x1xf32, #tpu.memory_space<vmem>>, vector<2x8x1xf32>
      tpu.vector_store %arg10[%c0_39, %c0_40, %c0_41], %43 {strides = array<i32>} : memref<2x8x1xf32, #tpu.memory_space<vmem>>, vector<2x8x1xf32>,
      %cst_42 = arith.constant 1.000000e+00 : f32
      %45 = vector.broadcast %cst_42 : f32 to vector<2x8x1xf32>
      %c0_43 = arith.constant 0 : index
      %c0_44 = arith.constant 0 : index
      %c0_45 = arith.constant 0 : index
      %46 = vector.load %arg11[%c0_43, %c0_44, %c0_45] : memref<2x8x1xf32, #tpu.memory_space<vmem>>, vector<2x8x1xf32>
      tpu.vector_store %arg11[%c0_43, %c0_44, %c0_45], %45 {strides = array<i32>} : memref<2x8x1xf32, #tpu.memory_space<vmem>>, vector<2x8x1xf32>,
      %47 = vector.shape_cast %37 : vector<1x16xf32> to vector<1x1x16xf32>
      %48 = vector.shape_cast %47 : vector<1x1x16xf32> to vector<1x1x16xf32>
      %49 = vector.broadcast %48 : vector<1x1x16xf32> to vector<2x8x16xf32>
      %c0_46 = arith.constant 0 : index
      %c0_47 = arith.constant 0 : index
      %c0_48 = arith.constant 0 : index
      %50 = vector.load %arg12[%c0_46, %c0_47, %c0_48] : memref<2x8x16xf32, #tpu.memory_space<vmem>>, vector<2x8x16xf32>
      tpu.vector_store %arg12[%c0_46, %c0_47, %c0_48], %49 {strides = array<i32>} : memref<2x8x16xf32, #tpu.memory_space<vmem>>, vector<2x8x16xf32>,
    } else {
    }
    %c0_4 = arith.constant 0 : index
    %c0_5 = arith.constant 0 : index
    %c0_6 = arith.constant 0 : index
    %c0_7 = arith.constant 0 : index
    %5 = vector.load %arg4[%c0_4, %c0_5, %c0_6, %c0_7] : memref<1x2x8x16xbf16, #tpu.memory_space<vmem>>, vector<1x2x8x16xbf16>
    %6 = vector.shape_cast %5 : vector<1x2x8x16xbf16> to vector<2x8x16xbf16>
    %c0_8 = arith.constant 0 : index
    %c0_9 = arith.constant 0 : index
    %c0_10 = arith.constant 0 : index
    %c0_11 = arith.constant 0 : index
    %7 = vector.load %arg5[%c0_8, %c0_9, %c0_10, %c0_11] : memref<1x2x8x16xbf16, #tpu.memory_space<vmem>>, vector<1x2x8x16xbf16>
    %8 = vector.shape_cast %7 : vector<1x2x8x16xbf16> to vector<2x8x16xbf16>
    "tpu.trace_start"() <{level = 10 : i32, message = "hqd,hkd->hqk"}> : () -> ()
    %cst = arith.constant dense<0.000000e+00> : vector<2x8x8xf32>
    %9 = tpu.matmul %1, %6, %cst {dimension_numbers = #tpu.dot_dimension_numbers<[2], [2], [1], [1], [0, 0, 0, 1, 1, 1], [0], [0]>} : vector<2x8x16xbf16>, vector<2x8x16xbf16>, vector<2x8x8xf32> -> vector<2x8x8xf32>
    "tpu.trace_stop"() : () -> ()
    %c0_12 = arith.constant 0 : index
    %c0_13 = arith.constant 0 : index
    %c0_14 = arith.constant 0 : index
    %10 = vector.load %arg10[%c0_12, %c0_13, %c0_14] : memref<2x8x1xf32, #tpu.memory_space<vmem>>, vector<2x8x1xf32>
    %cst_15 = arith.constant dense<0xFF800000> : vector<2x8xf32>
    %11 = vector.multi_reduction <maximumf>, %9, %cst_15 [2] : vector<2x8x8xf32> to vector<2x8xf32>
    %12 = vector.shape_cast %11 : vector<2x8xf32> to vector<2x8x1xf32>
    %13 = arith.maximumf %10, %12 : vector<2x8x1xf32>
    %14 = arith.subf %10, %13 : vector<2x8x1xf32>
    %15 = math.exp %14 : vector<2x8x1xf32>
    %16 = vector.broadcast %13 : vector<2x8x1xf32> to vector<2x8x8xf32>
    %17 = arith.subf %9, %16 : vector<2x8x8xf32>
    %18 = math.exp %17 : vector<2x8x8xf32>
    %c0_16 = arith.constant 0 : index
    %c0_17 = arith.constant 0 : index
    %c0_18 = arith.constant 0 : index
    %19 = vector.load %arg11[%c0_16, %c0_17, %c0_18] : memref<2x8x1xf32, #tpu.memory_space<vmem>>, vector<2x8x1xf32>
    %20 = arith.mulf %15, %19 : vector<2x8x1xf32>
    %cst_19 = arith.constant dense<0.000000e+00> : vector<2x8xf32>
    %21 = vector.multi_reduction <add>, %18, %cst_19 [2] : vector<2x8x8xf32> to vector<2x8xf32>
    %22 = vector.shape_cast %21 : vector<2x8xf32> to vector<2x8x1xf32>
    %23 = arith.addf %20, %22 : vector<2x8x1xf32>
    %c0_20 = arith.constant 0 : index
    %c0_21 = arith.constant 0 : index
    %c0_22 = arith.constant 0 : index
    %24 = vector.load %arg11[%c0_20, %c0_21, %c0_22] : memref<2x8x1xf32, #tpu.memory_space<vmem>>, vector<2x8x1xf32>
    tpu.vector_store %arg11[%c0_20, %c0_21, %c0_22], %23 {strides = array<i32>} : memref<2x8x1xf32, #tpu.memory_space<vmem>>, vector<2x8x1xf32>,
    %c0_23 = arith.constant 0 : index
    %c0_24 = arith.constant 0 : index
    %c0_25 = arith.constant 0 : index
    %25 = vector.load %arg12[%c0_23, %c0_24, %c0_25] : memref<2x8x16xf32, #tpu.memory_space<vmem>>, vector<2x8x16xf32>
    %26 = vector.broadcast %15 : vector<2x8x1xf32> to vector<2x8x16xf32>
    %27 = arith.mulf %26, %25 : vector<2x8x16xf32>
    %28 = arith.truncf %18 : vector<2x8x8xf32> to vector<2x8x8xbf16>
    "tpu.trace_start"() <{level = 10 : i32, message = "hqk,hkd->hqd"}> : () -> ()
    %cst_26 = arith.constant dense<0.000000e+00> : vector<2x8x16xf32>
    %29 = tpu.matmul %28, %8, %cst_26 {dimension_numbers = #tpu.dot_dimension_numbers<[2], [1], [1], [2], [0, 0, 0, 1, 1, 2], [0], [0]>} : vector<2x8x8xbf16>, vector<2x8x16xbf16>, vector<2x8x16xf32> -> vector<2x8x16xf32>
    "tpu.trace_stop"() : () -> ()
    %30 = arith.addf %27, %29 : vector<2x8x16xf32>
    %c0_27 = arith.constant 0 : index
    %c0_28 = arith.constant 0 : index
    %c0_29 = arith.constant 0 : index
    %31 = vector.load %arg12[%c0_27, %c0_28, %c0_29] : memref<2x8x16xf32, #tpu.memory_space<vmem>>, vector<2x8x16xf32>
    tpu.vector_store %arg12[%c0_27, %c0_28, %c0_29], %30 {strides = array<i32>} : memref<2x8x16xf32, #tpu.memory_space<vmem>>, vector<2x8x16xf32>,
    %c0_30 = arith.constant 0 : index
    %c0_31 = arith.constant 0 : index
    %c0_32 = arith.constant 0 : index
    %32 = vector.load %arg10[%c0_30, %c0_31, %c0_32] : memref<2x8x1xf32, #tpu.memory_space<vmem>>, vector<2x8x1xf32>
    tpu.vector_store %arg10[%c0_30, %c0_31, %c0_32], %13 {strides = array<i32>} : memref<2x8x1xf32, #tpu.memory_space<vmem>>, vector<2x8x1xf32>,
    %c0_i32_33 = arith.constant 0 : i32
    %33 = arith.cmpi eq, %arg2, %c0_i32_33 : i32
    %34 = arith.extui %33 : i1 to i32
    %c0_i32_34 = arith.constant 0 : i32
    %35 = arith.cmpi ne, %34, %c0_i32_34 : i32
    scf.if %35 {
      %c0_35 = arith.constant 0 : index
      %c0_36 = arith.constant 0 : index
      %c0_37 = arith.constant 0 : index
      %36 = vector.load %arg11[%c0_35, %c0_36, %c0_37] : memref<2x8x1xf32, #tpu.memory_space<vmem>>, vector<2x8x1xf32>
      %37 = tpu.reciprocal %36 : vector<2x8x1xf32> -> vector<2x8x1xf32>
      %c0_38 = arith.constant 0 : index
      %c0_39 = arith.constant 0 : index
      %c0_40 = arith.constant 0 : index
      %38 = vector.load %arg12[%c0_38, %c0_39, %c0_40] : memref<2x8x16xf32, #tpu.memory_space<vmem>>, vector<2x8x16xf32>
      %39 = vector.broadcast %37 : vector<2x8x1xf32> to vector<2x8x16xf32>
      %40 = arith.mulf %38, %39 : vector<2x8x16xf32>
      %41 = vector.extract_strided_slice %40 {offsets = [0, 0, 0], sizes = [1, 8, 16], strides = [1, 1, 1]} : vector<2x8x16xf32> to vector<1x8x16xf32>
      %42 = vector.shape_cast %41 : vector<1x8x16xf32> to vector<8x16xf32>
      %43 = vector.extract_strided_slice %40 {offsets = [1, 0, 0], sizes = [1, 8, 16], strides = [1, 1, 1]} : vector<2x8x16xf32> to vector<1x8x16xf32>
      %44 = vector.shape_cast %43 : vector<1x8x16xf32> to vector<8x16xf32>
      %45 = tpu.concatenate %42, %44 in 1 : vector<8x16xf32>, vector<8x16xf32> -> vector<8x32xf32>
      %46 = arith.truncf %45 : vector<8x32xf32> to vector<8x32xbf16>
      %c0_41 = arith.constant 0 : index
      %c0_42 = arith.constant 0 : index
      %47 = vector.load %arg7[%c0_41, %c0_42] : memref<32x128xbf16, #tpu.memory_space<vmem>>, vector<32x128xbf16>
      %cst_43 = arith.constant dense<0.000000e+00> : vector<8x128xf32>
      %48 = tpu.matmul %46, %47, %cst_43 {dimension_numbers = #tpu.dot_dimension_numbers<[1], [0], [0], [1], [0, 0, 1, 1], [], []>} : vector<8x32xbf16>, vector<32x128xbf16>, vector<8x128xf32> -> vector<8x128xf32>
      %cst_44 = arith.constant dense<0.000000e+00> : vector<8xf32>
      %49 = vector.multi_reduction <add>, %48, %cst_44 [1] : vector<8x128xf32> to vector<8xf32>
      %50 = vector.shape_cast %49 : vector<8xf32> to vector<8x1xf32>
      %cst_45 = arith.constant 3.125000e-02 : f32
      %51 = vector.broadcast %cst_45 : f32 to vector<8x1xf32>
      %52 = arith.mulf %50, %51 : vector<8x1xf32>
      %53 = arith.mulf %48, %48 : vector<8x128xf32>
      %cst_46 = arith.constant dense<0.000000e+00> : vector<8xf32>
      %54 = vector.multi_reduction <add>, %53, %cst_46 [1] : vector<8x128xf32> to vector<8xf32>
      %55 = vector.shape_cast %54 : vector<8xf32> to vector<8x1xf32>
      %cst_47 = arith.constant 3.125000e-02 : f32
      %56 = vector.broadcast %cst_47 : f32 to vector<8x1xf32>
      %57 = arith.mulf %55, %56 : vector<8x1xf32>
      %58 = arith.mulf %52, %52 : vector<8x1xf32>
      %59 = arith.subf %57, %58 : vector<8x1xf32>
      %60 = vector.broadcast %52 : vector<8x1xf32> to vector<8x128xf32>
      %61 = arith.subf %48, %60 : vector<8x128xf32>
      %cst_48 = arith.constant 9.99999974E-6 : f32
      %62 = vector.broadcast %cst_48 : f32 to vector<8x1xf32>
      %63 = arith.addf %59, %62 : vector<8x1xf32>
      %64 = math.rsqrt %63 : vector<8x1xf32>
      %65 = vector.broadcast %64 : vector<8x1xf32> to vector<8x128xf32>
      %66 = arith.mulf %61, %65 : vector<8x128xf32>
      %c0_49 = arith.constant 0 : index
      %c0_50 = arith.constant 0 : index
      %67 = vector.load %arg8[%c0_49, %c0_50] : memref<1x128xf32, #tpu.memory_space<vmem>>, vector<1x128xf32>
      %68 = vector.broadcast %67 : vector<1x128xf32> to vector<8x128xf32>
      %69 = arith.mulf %66, %68 : vector<8x128xf32>
      %c0_51 = arith.constant 0 : index
      %c0_52 = arith.constant 0 : index
      %c0_53 = arith.constant 0 : index
      %70 = vector.load %arg9[%c0_51, %c0_52, %c0_53] : memref<1x8x128xf32, #tpu.memory_space<vmem>>, vector<1x8x128xf32>
      %71 = vector.shape_cast %70 : vector<1x8x128xf32> to vector<8x128xf32>
      %72 = vector.shape_cast %69 : vector<8x128xf32> to vector<1x8x128xf32>
      tpu.vector_store %arg9[%c0_51, %c0_52, %c0_53], %72 {strides = array<i32>} : memref<1x8x128xf32, #tpu.memory_space<vmem>>, vector<1x8x128xf32>,
    } else {
    }
    return
  }
  func.func @transform_0(%arg0: i32, %arg1: i32, %arg2: i32) -> (i32, i32, i32, i32) {
    %c0_i32 = arith.constant 0 : i32
    %c0_i32_0 = arith.constant 0 : i32
    %c0_i32_1 = arith.constant 0 : i32
    return %arg0, %c0_i32, %arg1, %c0_i32_0 : i32, i32, i32, i32
  }
  func.func @transform_1(%arg0: i32, %arg1: i32, %arg2: i32) -> (i32, i32, i32, i32) {
    %c0_i32 = arith.constant 0 : i32
    %c0_i32_0 = arith.constant 0 : i32
    %c0_i32_1 = arith.constant 0 : i32
    return %arg0, %c0_i32, %arg2, %c0_i32_0 : i32, i32, i32, i32
  }
  func.func @transform_2(%arg0: i32, %arg1: i32, %arg2: i32) -> (i32, i32, i32, i32) {
    %c0_i32 = arith.constant 0 : i32
    %c0_i32_0 = arith.constant 0 : i32
    %c0_i32_1 = arith.constant 0 : i32
    return %arg0, %c0_i32, %arg2, %c0_i32_0 : i32, i32, i32, i32
  }
  func.func @transform_3(%arg0: i32, %arg1: i32, %arg2: i32) -> (i32, i32) {
    %c0_i32 = arith.constant 0 : i32
    %c0_i32_0 = arith.constant 0 : i32
    %c0_i32_1 = arith.constant 0 : i32
    return %c0_i32, %c0_i32_0 : i32, i32
  }
  func.func @transform_4(%arg0: i32, %arg1: i32, %arg2: i32) -> (i32, i32) {
    %c0_i32 = arith.constant 0 : i32
    %c0_i32_0 = arith.constant 0 : i32
    %c0_i32_1 = arith.constant 0 : i32
    return %c0_i32, %c0_i32_0 : i32, i32
  }
  func.func @transform_5(%arg0: i32, %arg1: i32, %arg2: i32) -> (i32, i32) {
    %c0_i32 = arith.constant 0 : i32
    %c0_i32_0 = arith.constant 0 : i32
    %c0_i32_1 = arith.constant 0 : i32
    return %c0_i32, %c0_i32_0 : i32, i32
  }
  func.func @transform_6(%arg0: i32, %arg1: i32, %arg2: i32) -> (i32, i32, i32) {
    %c0_i32 = arith.constant 0 : i32
    %c0_i32_0 = arith.constant 0 : i32
    return %arg0, %arg1, %c0_i32 : i32, i32, i32
  }
}

</mosaic_0001>

<llo_original>
// kernel: tpu_custom_call.1
$region0: #{tpu_custom_call.1}
  #allocation0 [shape = 'u32[]', space=smem, size = 0x4, offset = 0x4, fixed_abs, tag = 'smem constant byte address 0x4 - core index']
  #allocation1 [shape = 'u32[144,128]{1,0:T(1,128)}', space=vmem, size = 0x12000, scoped, tag = 'internal scratch']
  #allocation2 [shape = 'f32[2,8,1]{2,1,0:T(8,128)}', space=vmem, size = 0x2000, scoped, tag = 'scratch operand']
  #allocation3 [shape = 'f32[2,8,1]{2,1,0:T(8,128)}', space=vmem, size = 0x2000, scoped, tag = 'scratch operand']
  #allocation4 [shape = 'f32[2,8,16]{2,1,0:T(8,128)}', space=vmem, size = 0x2000, scoped, tag = 'scratch operand']
  %s0 = inlined_call_operand.hbm [shape: bf16[2,2,8,16], index: 0, kind: input, shape index: {}]
  %s1 = inlined_call_operand.hbm [shape: bf16[2,2,8,16], index: 1, kind: input, shape index: {}]
  %s2 = inlined_call_operand.hbm [shape: bf16[2,2,8,16], index: 2, kind: input, shape index: {}]
  %s3 = inlined_call_operand.vmem [shape: f32[2,16], index: 3, kind: input, shape index: {}]
  %s4 = inlined_call_operand.hbm [shape: bf16[32,128], index: 4, kind: input, shape index: {}]
  %s5 = inlined_call_operand.vmem [shape: f32[1,128], index: 5, kind: input, shape index: {}]
  %s6 = inlined_call_operand.hbm [shape: f32[2,8,128], index: 6, kind: output, shape index: {}]
  %s7 = sld [smem:[#allocation0]]
  $region81: #{tpu_custom_call.1} parent=0
    _
  %s9 = ssub.s32 1, %s7
  %s10 = scalar_select 0, %s9, %s7
  $region1: #{tpu_custom_call.1} parent=0
    #allocation5 [shape = 'u8[8192]{0}', space=vmem, size = 0x2000, scoped, tag = 'input window, operand 0']
    #allocation6 [shape = 's32[2]{0}', space=sflag, size = 0x8, scoped, tag = 'scoped memory for tpu_custom_call.1']
    #allocation7 [shape = 's32[2]{0}', space=sflag, size = 0x8, scoped, tag = 'scoped memory for tpu_custom_call.1']
    #allocation8 [shape = 'u8[8192]{0}', space=vmem, size = 0x2000, scoped, tag = 'input window, operand 1']
    #allocation9 [shape = 's32[2]{0}', space=sflag, size = 0x8, scoped, tag = 'scoped memory for tpu_custom_call.1']
    #allocation10 [shape = 'u8[8192]{0}', space=vmem, size = 0x2000, scoped, tag = 'input window, operand 2']
    #allocation11 [shape = 'u8[8192]{0}', space=vmem, size = 0x2000, scoped, tag = 'input window, operand 4, single buffered']
    #allocation12 [shape = 's32[1]{0}', space=sflag, size = 0x4, scoped, tag = 'scoped memory for tpu_custom_call.1']
    #allocation13 [shape = 'u8[8192]{0}', space=vmem, size = 0x2000, scoped, tag = 'output window, operand 0']
    %11 = vsyncpa [#allocation6], 0
    %s12 = scalar_lea.sflag [#allocation6], 1
    %13 = vsyncpa %s12, 0
    %14 = vsyncpa [#allocation9], 0
    %s15 = scalar_lea.sflag [#allocation9], 1
    %16 = vsyncpa %s15, 0
    %17 = vsyncpa [#allocation12], 0
    %18 = vsyncpa [#allocation7], 0
    %s19 = scalar_lea.sflag [#allocation7], 1
    %20 = vsyncpa %s19, 0
    loop: start=0, step=1, limit=4
    $region2: #{tpu_custom_call.1} parent=1 // loop_pre_header
      _
    $region3: #{tpu_custom_call.1} parent=1 // loop_header
      %s22 = sphi 0, %s26
      %p23 = scmp.ge.s32.totalorder %s22, 4
      %s29 = sphi 0, %s48
      %s30 = sphi 0, %s44
      %s31 = sphi 0, %s40
      %s32 = sphi 0, %s29
      %s33 = sphi 0, %s30
      %s34 = sphi 0, %s31
      %s35 = sphi 0, %s32
      %s36 = sphi 0, %s33
      %s37 = sphi 0, %s34
      %s53 = sphi 0, %s55
      %s56 = sphi 0, %s53
      %s57 = sphi 0, %s56
      %s73 = sphi 0, %s57
      %s81 = sphi 0, %s83
      %s84 = sphi 0, %s81
      %s85 = sphi 0, %s84
      %s101 = sphi 0, %s85
      %s109 = sphi 0, %s111
      %s112 = sphi 0, %s109
      %s113 = sphi 0, %s112
      %s129 = sphi 0, %s113
      %s133 = sphi 0, %s133
      %s135 = sphi 0, %s133
      %s136 = sphi 0, %s135
      %s150 = sphi 0, %s136
      %s154 = sphi 0, %s154
      %s156 = sphi 0, %s154
      %s157 = sphi 0, %s156
      %s171 = sphi 0, %s157
      %s175 = sphi 0, %s175
      %s177 = sphi 0, %s175
      %s178 = sphi 0, %s177
      %s192 = sphi 0, %s178
      %s200 = sphi 0, %s202
      %s203 = sphi 0, %s200
      %s204 = sphi 0, %s203
      %s220 = sphi 0, %s204
    $region4: #{tpu_custom_call.1} parent=1 // loop_header_branch
      %25 = sbr.rel (%p23) target = $region8
    $region5: #{tpu_custom_call.1} parent=1 // loop_body
      %s27 = ssub.s32 %s22, 1
      %s28 = ssub.s32 %s22, 2
      %s38 = sadd.s32 1, %s31
      %p39 = scmp.ge.s32.totalorder %s38, 1
      %s40 = scalar_select %p39, 0, %s38
      %s41 = sadd.s32 1, %s30
      %s42 = scalar_select %p39, %s41, %s30
      %p43 = scmp.ge.s32.totalorder %s42, 1
      %s44 = scalar_select %p43, 0, %s42
      %s45 = sadd.s32 1, %s29
      %s46 = scalar_select %p43, %s45, %s29
      %p47 = scmp.ge.s32.totalorder %s46, 2
      %s48 = scalar_select %p47, 0, %s46
      %s49 = ssub.s32 %s29, %s48
      %s50 = ssub.s32 %s30, %s44
      %s51 = sor.u32 %s49, %s50
      %p52 = scmp.eq.s32.totalorder %s51, 0
      %s54 = sadd.s32 %s53, 1
      %s55 = scalar_select %p52, %s53, %s54
      %p58 = pneg %p52
      %p59 = scmp.eq.s32.totalorder %s22, 1
      %p60 = por %p58, %p59
      %p61 = scmp.ne.s32.totalorder %s53, %s56
      %p62 = scmp.eq.s32.totalorder %s22, 0
      %p63 = por %p61, %p62
      %p64 = scmp.ne.s32.totalorder %s53, %s56
      %p65 = scmp.eq.s32.totalorder %s27, 1
      %p66 = por %p64, %p65
      %p67 = scmp.ne.s32.totalorder %s56, %s57
      %p68 = scmp.eq.s32.totalorder %s27, 0
      %p69 = por %p67, %p68
      %p70 = scmp.ne.s32.totalorder %s56, %s57
      %p71 = scmp.eq.s32.totalorder %s28, 1
      %p72 = por %p70, %p71
      %p74 = scmp.ne.s32.totalorder %s57, %s73
      %p75 = scmp.eq.s32.totalorder %s28, 0
      %p76 = por %p74, %p75
      %s77 = ssub.s32 %s29, %s48
      %s78 = ssub.s32 %s31, %s40
      %s79 = sor.u32 %s77, %s78
      %p80 = scmp.eq.s32.totalorder %s79, 0
      %s82 = sadd.s32 %s81, 1
      %s83 = scalar_select %p80, %s81, %s82
      %p86 = pneg %p80
      %p87 = scmp.eq.s32.totalorder %s22, 1
      %p88 = por %p86, %p87
      %p89 = scmp.ne.s32.totalorder %s81, %s84
      %p90 = scmp.eq.s32.totalorder %s22, 0
      %p91 = por %p89, %p90
      %p92 = scmp.ne.s32.totalorder %s81, %s84
      %p93 = scmp.eq.s32.totalorder %s27, 1
      %p94 = por %p92, %p93
      %p95 = scmp.ne.s32.totalorder %s84, %s85
      %p96 = scmp.eq.s32.totalorder %s27, 0
      %p97 = por %p95, %p96
      %p98 = scmp.ne.s32.totalorder %s84, %s85
      %p99 = scmp.eq.s32.totalorder %s28, 1
      %p100 = por %p98, %p99
      %p102 = scmp.ne.s32.totalorder %s85, %s101
      %p103 = scmp.eq.s32.totalorder %s28, 0
      %p104 = por %p102, %p103
      %s105 = ssub.s32 %s29, %s48
      %s106 = ssub.s32 %s31, %s40
      %s107 = sor.u32 %s105, %s106
      %p108 = scmp.eq.s32.totalorder %s107, 0
      %s110 = sadd.s32 %s109, 1
      %s111 = scalar_select %p108, %s109, %s110
      %p114 = pneg %p108
      %p115 = scmp.eq.s32.totalorder %s22, 1
      %p116 = por %p114, %p115
      %p117 = scmp.ne.s32.totalorder %s109, %s112
      %p118 = scmp.eq.s32.totalorder %s22, 0
      %p119 = por %p117, %p118
      %p120 = scmp.ne.s32.totalorder %s109, %s112
      %p121 = scmp.eq.s32.totalorder %s27, 1
      %p122 = por %p120, %p121
      %p123 = scmp.ne.s32.totalorder %s112, %s113
      %p124 = scmp.eq.s32.totalorder %s27, 0
      %p125 = por %p123, %p124
      %p126 = scmp.ne.s32.totalorder %s112, %s113
      %p127 = scmp.eq.s32.totalorder %s28, 1
      %p128 = por %p126, %p127
      %p130 = scmp.ne.s32.totalorder %s113, %s129
      %p131 = scmp.eq.s32.totalorder %s28, 0
      %p132 = por %p130, %p131
      %s134 = sadd.s32 %s133, 1
      %p137 = scmp.eq.s32.totalorder %s22, 1
      %p138 = scmp.ne.s32.totalorder %s133, %s135
      %p139 = scmp.eq.s32.totalorder %s22, 0
      %p140 = por %p138, %p139
      %p141 = scmp.ne.s32.totalorder %s133, %s135
      %p142 = scmp.eq.s32.totalorder %s27, 1
      %p143 = por %p141, %p142
      %p144 = scmp.ne.s32.totalorder %s135, %s136
      %p145 = scmp.eq.s32.totalorder %s27, 0
      %p146 = por %p144, %p145
      %p147 = scmp.ne.s32.totalorder %s135, %s136
      %p148 = scmp.eq.s32.totalorder %s28, 1
      %p149 = por %p147, %p148
      %p151 = scmp.ne.s32.totalorder %s136, %s150
      %p152 = scmp.eq.s32.totalorder %s28, 0
      %p153 = por %p151, %p152
      %s155 = sadd.s32 %s154, 1
      %p158 = scmp.eq.s32.totalorder %s22, 1
      %p159 = scmp.ne.s32.totalorder %s154, %s156
      %p160 = scmp.eq.s32.totalorder %s22, 0
      %p161 = por %p159, %p160
      %p162 = scmp.ne.s32.totalorder %s154, %s156
      %p163 = scmp.eq.s32.totalorder %s27, 1
      %p164 = por %p162, %p163
      %p165 = scmp.ne.s32.totalorder %s156, %s157
      %p166 = scmp.eq.s32.totalorder %s27, 0
      %p167 = por %p165, %p166
      %p168 = scmp.ne.s32.totalorder %s156, %s157
      %p169 = scmp.eq.s32.totalorder %s28, 1
      %p170 = por %p168, %p169
      %p172 = scmp.ne.s32.totalorder %s157, %s171
      %p173 = scmp.eq.s32.totalorder %s28, 0
      %p174 = por %p172, %p173
      %s176 = sadd.s32 %s175, 1
      %p179 = scmp.eq.s32.totalorder %s22, 1
      %p180 = scmp.ne.s32.totalorder %s175, %s177
      %p181 = scmp.eq.s32.totalorder %s22, 0
      %p182 = por %p180, %p181
      %p183 = scmp.ne.s32.totalorder %s175, %s177
      %p184 = scmp.eq.s32.totalorder %s27, 1
      %p185 = por %p183, %p184
      %p186 = scmp.ne.s32.totalorder %s177, %s178
      %p187 = scmp.eq.s32.totalorder %s27, 0
      %p188 = por %p186, %p187
      %p189 = scmp.ne.s32.totalorder %s177, %s178
      %p190 = scmp.eq.s32.totalorder %s28, 1
      %p191 = por %p189, %p190
      %p193 = scmp.ne.s32.totalorder %s178, %s192
      %p194 = scmp.eq.s32.totalorder %s28, 0
      %p195 = por %p193, %p194
      %s196 = ssub.s32 %s29, %s48
      %s197 = ssub.s32 %s30, %s44
      %s198 = sor.u32 %s196, %s197
      %p199 = scmp.eq.s32.totalorder %s198, 0
      %s201 = sadd.s32 %s200, 1
      %s202 = scalar_select %p199, %s200, %s201
      %p205 = pneg %p199
      %p206 = scmp.eq.s32.totalorder %s22, 1
      %p207 = por %p205, %p206
      %p208 = scmp.ne.s32.totalorder %s200, %s203
      %p209 = scmp.eq.s32.totalorder %s22, 0
      %p210 = por %p208, %p209
      %p211 = scmp.ne.s32.totalorder %s200, %s203
      %p212 = scmp.eq.s32.totalorder %s27, 1
      %p213 = por %p211, %p212
      %p214 = scmp.ne.s32.totalorder %s203, %s204
      %p215 = scmp.eq.s32.totalorder %s27, 0
      %p216 = por %p214, %p215
      %p217 = scmp.ne.s32.totalorder %s203, %s204
      %p218 = scmp.eq.s32.totalorder %s28, 1
      %p219 = por %p217, %p218
      %p221 = scmp.ne.s32.totalorder %s204, %s220
      %p222 = scmp.eq.s32.totalorder %s28, 0
      %p223 = por %p221, %p222
      %p224 = scmp.le.s32.totalorder 1, %s22
      %p225 = scmp.lt.s32.totalorder %s22, 3
      %p226 = pnand %p224, %p225
      %p227 = pneg %p226
      // Predicated region
      $region9: #{tpu_custom_call.1} parent=5 // pred_check
        _
      $region10: #{tpu_custom_call.1} parent=5 // pred_check_branch
        %229 = sbr.rel (%p226) target = $region12
      $region11: #{tpu_custom_call.1} parent=5 // pred_region
        %s230 = ssub.s32 %s22, 1
        // Predicated region
        $region13: #{tpu_custom_call.1} parent=11 // pred_check
          %p231 = pneg %p146
        $region14: #{tpu_custom_call.1} parent=11 // pred_check_branch
          %233 = sbr.rel (%p231) target = $region16
        $region15: #{tpu_custom_call.1} parent=11 // pred_region
          _
        $region16: #{tpu_custom_call.1} parent=11 // pred_fallthru
          _
        // Predicated region
        $region17: #{tpu_custom_call.1} parent=11 // pred_check
          %p234 = pneg %p167
        $region18: #{tpu_custom_call.1} parent=11 // pred_check_branch
          %236 = sbr.rel (%p234) target = $region20
        $region19: #{tpu_custom_call.1} parent=11 // pred_region
          %s238 = ssub.s32 256, 256
          %239 = vsyncadd [#allocation12], %s238
          %s240 = sshll.u32 [#allocation11], 4
          %s241 = int_to_ptr.vmem [resolvable:$true] %s240
          %246 = dma.hbm_to_vmem [thread:$0]  %s4, 256, %s241, [#allocation12], 64, 64, 4
        $region20: #{tpu_custom_call.1} parent=11 // pred_fallthru
          _
        // Predicated region
        $region21: #{tpu_custom_call.1} parent=11 // pred_check
          %p247 = pneg %p188
        $region22: #{tpu_custom_call.1} parent=11 // pred_check_branch
          %249 = sbr.rel (%p247) target = $region24
        $region23: #{tpu_custom_call.1} parent=11 // pred_region
          _
        $region24: #{tpu_custom_call.1} parent=11 // pred_fallthru
          _
      $region12: #{tpu_custom_call.1} parent=5 // pred_fallthru
        _
      %p250 = scmp.lt.s32.totalorder %s22, 2
      // Predicated region
      $region25: #{tpu_custom_call.1} parent=5 // pred_check
        %p251 = pneg %p250
      $region26: #{tpu_custom_call.1} parent=5 // pred_check_branch
        %253 = sbr.rel (%p251) target = $region28
      $region27: #{tpu_custom_call.1} parent=5 // pred_region
        // Predicated region
        $region29: #{tpu_custom_call.1} parent=27 // pred_check
          %p254 = pneg %p63
        $region30: #{tpu_custom_call.1} parent=27 // pred_check_branch
          %256 = sbr.rel (%p254) target = $region32
        $region31: #{tpu_custom_call.1} parent=27 // pred_region
          %s257 = sand.u32 %s53, 1
          %s258 = scalar_lea.sflag [#allocation6], %s257
          %s259 = sand.u32 %s53, 1
          %s260 = smul.addr %s259, 8
          %s261 = scalar_lea.vmem [#allocation5], %s260
          %s263 = ssub.s32 128, 128
          %264 = vsyncadd %s258, %s263
          %s265 = smul.addr %s29, 2
          %s266 = sadd.s32 %s30, %s265
          %s267 = smul.addr %s266, 64
          %s268 = scalar_lea.hbm %s0, %s267
          %s269 = sshll.u32 %s261, 4
          %s270 = int_to_ptr.vmem [resolvable:$true] %s269
          %275 = dma.hbm_to_vmem [thread:$0]  %s268, 128, %s270, %s258, 64, 64, 4
        $region32: #{tpu_custom_call.1} parent=27 // pred_fallthru
          _
        // Predicated region
        $region33: #{tpu_custom_call.1} parent=27 // pred_check
          %p276 = pneg %p91
        $region34: #{tpu_custom_call.1} parent=27 // pred_check_branch
          %278 = sbr.rel (%p276) target = $region36
        $region35: #{tpu_custom_call.1} parent=27 // pred_region
          %s279 = sand.u32 %s22, 1
          %s280 = scalar_lea.sflag [#allocation9], %s279
          %s281 = sand.u32 %s81, 1
          %s282 = smul.addr %s281, 8
          %s283 = scalar_lea.vmem [#allocation8], %s282
          %s285 = ssub.s32 128, 128
          %286 = vsyncadd %s280, %s285
          %s287 = smul.addr %s29, 2
          %s288 = sadd.s32 %s31, %s287
          %s289 = smul.addr %s288, 64
          %s290 = scalar_lea.hbm %s1, %s289
          %s291 = sshll.u32 %s283, 4
          %s292 = int_to_ptr.vmem [resolvable:$true] %s291
          %297 = dma.hbm_to_vmem [thread:$0]  %s290, 128, %s292, %s280, 64, 64, 4
        $region36: #{tpu_custom_call.1} parent=27 // pred_fallthru
          _
        // Predicated region
        $region37: #{tpu_custom_call.1} parent=27 // pred_check
          %p298 = pneg %p119
        $region38: #{tpu_custom_call.1} parent=27 // pred_check_branch
          %300 = sbr.rel (%p298) target = $region40
        $region39: #{tpu_custom_call.1} parent=27 // pred_region
          %s301 = sand.u32 %s22, 1
          %s302 = scalar_lea.sflag [#allocation9], %s301
          %s303 = sand.u32 %s109, 1
          %s304 = smul.addr %s303, 8
          %s305 = scalar_lea.vmem [#allocation10], %s304
          %s307 = ssub.s32 128, 128
          %308 = vsyncadd %s302, %s307
          %s309 = smul.addr %s29, 2
          %s310 = sadd.s32 %s31, %s309
          %s311 = smul.addr %s310, 64
          %s312 = scalar_lea.hbm %s2, %s311
          %s313 = sshll.u32 %s305, 4
          %s314 = int_to_ptr.vmem [resolvable:$true] %s313
          %319 = dma.hbm_to_vmem [thread:$0]  %s312, 128, %s314, %s302, 64, 64, 4
        $region40: #{tpu_custom_call.1} parent=27 // pred_fallthru
          _
      $region28: #{tpu_custom_call.1} parent=5 // pred_fallthru
        _
      %p320 = scmp.le.s32.totalorder 1, %s22
      %p321 = scmp.lt.s32.totalorder %s22, 3
      %p322 = pnand %p320, %p321
      %p323 = pneg %p322
      // Predicated region
      $region41: #{tpu_custom_call.1} parent=5 // pred_check
        _
      $region42: #{tpu_custom_call.1} parent=5 // pred_check_branch
        %325 = sbr.rel (%p322) target = $region44
      $region43: #{tpu_custom_call.1} parent=5 // pred_region
        %s326 = ssub.s32 %s22, 1
        %s327 = sand.u32 %s56, 1
        %s328 = scalar_lea.sflag [#allocation6], %s327
        %s329 = sand.u32 %s56, 1
        %s330 = smul.addr %s329, 8
        %s331 = scalar_lea.vmem [#allocation5], %s330
        // Predicated region
        $region45: #{tpu_custom_call.1} parent=43 // pred_check
          %p332 = pneg %p69
        $region46: #{tpu_custom_call.1} parent=43 // pred_check_branch
          %334 = sbr.rel (%p332) target = $region48
        $region47: #{tpu_custom_call.1} parent=43 // pred_region
          %335 = dma.done %s328, 128
        $region48: #{tpu_custom_call.1} parent=43 // pred_fallthru
          _
        %s336 = sand.u32 %s27, 1
        %s337 = scalar_lea.sflag [#allocation9], %s336
        %s338 = sand.u32 %s84, 1
        %s339 = smul.addr %s338, 8
        %s340 = scalar_lea.vmem [#allocation8], %s339
        // Predicated region
        $region49: #{tpu_custom_call.1} parent=43 // pred_check
          %p341 = pneg %p97
        $region50: #{tpu_custom_call.1} parent=43 // pred_check_branch
          %343 = sbr.rel (%p341) target = $region52
        $region51: #{tpu_custom_call.1} parent=43 // pred_region
          %344 = dma.done %s337, 128
        $region52: #{tpu_custom_call.1} parent=43 // pred_fallthru
          _
        %s345 = sand.u32 %s27, 1
        %s346 = scalar_lea.sflag [#allocation9], %s345
        %s347 = sand.u32 %s112, 1
        %s348 = smul.addr %s347, 8
        %s349 = scalar_lea.vmem [#allocation10], %s348
        // Predicated region
        $region53: #{tpu_custom_call.1} parent=43 // pred_check
          %p350 = pneg %p125
        $region54: #{tpu_custom_call.1} parent=43 // pred_check_branch
          %352 = sbr.rel (%p350) target = $region56
        $region55: #{tpu_custom_call.1} parent=43 // pred_region
          %353 = dma.done %s346, 128
        $region56: #{tpu_custom_call.1} parent=43 // pred_fallthru
          _
        // Predicated region
        $region57: #{tpu_custom_call.1} parent=43 // pred_check
          %p354 = pneg %p167
        $region58: #{tpu_custom_call.1} parent=43 // pred_check_branch
          %356 = sbr.rel (%p354) target = $region60
        $region59: #{tpu_custom_call.1} parent=43 // pred_region
          %357 = dma.done [#allocation12], 256
        $region60: #{tpu_custom_call.1} parent=43 // pred_fallthru
          _
        %s358 = sand.u32 %s56, 1
        %s359 = scalar_lea.sflag [#allocation6], %s358
        %s360 = sand.u32 %s56, 1
        %s361 = smul.addr %s360, 8
        %s362 = scalar_lea.vmem [#allocation5], %s361
        %p363 = pneg %p69
        %p364 = pneg %p66
        %s365 = sand.u32 %s27, 1
        %s366 = scalar_lea.sflag [#allocation9], %s365
        %s367 = sand.u32 %s84, 1
        %s368 = smul.addr %s367, 8
        %s369 = scalar_lea.vmem [#allocation8], %s368
        %p370 = pneg %p97
        %p371 = pneg %p94
        %s372 = sand.u32 %s27, 1
        %s373 = scalar_lea.sflag [#allocation9], %s372
        %s374 = sand.u32 %s112, 1
        %s375 = smul.addr %s374, 8
        %s376 = scalar_lea.vmem [#allocation10], %s375
        %p377 = pneg %p125
        %p378 = pneg %p122
        %p379 = pneg %p146
        %p380 = pneg %p143
        %p381 = pneg %p167
        %p382 = pneg %p164
        %p383 = pneg %p188
        %p384 = pneg %p185
        %p385 = pneg %p216
        %p386 = pneg %p213
        %s387 = sand.u32 %s203, 1
        %s388 = scalar_lea.sflag [#allocation7], %s387
        %s389 = sand.u32 %s203, 1
        %s390 = smul.addr %s389, 8
        %s391 = scalar_lea.vmem [#allocation13], %s390
        %v393 = vld [vmem:[%s331] sm:$0xf]
        %v394 = vld [vmem:[%s331 + $0x4] sm:$0xf]
        %p395 = scmp.eq.s32.totalorder %s34, 0
        // Predicated region
        $region61: #{tpu_custom_call.1} parent=43 // pred_check
          %p396 = pneg %p395
        $region62: #{tpu_custom_call.1} parent=43 // pred_check_branch
          %398 = sbr.rel (%p396) target = $region64
        $region63: #{tpu_custom_call.1} parent=43 // pred_region
          %v399 = vld [vmem:[%s3] sm:$0x1]
          %v400 = vld [vmem:[%s3 + $0x1] sm:$0x1]
          %v401 = vunpack.c.l.bf16 %v393
          %v402 = vunpack.c.l.bf16 %v394
          %v403 = vlaneseq
          %v404 = vshrl.u32 %v403, 7
          %v405 = vsub.s32 0, %v404
          %v406 = vrot.slane %v399, %v405
          %v407 = vmul.f32 %v401, %v406
          %v408 = vmul.f32 %v402, %v406
          %vm409 = vcmask 130048
          %v410 = vsel %vm409, %v407, 0.0
          %411 = vadd.xlane.f32.xlu0 %v410
          %v412 = vpop.xlane.xlu0 %411
          %v413 = vsel %vm409, %v408, 0.0
          %414 = vadd.xlane.f32.xlu0 %v413
          %v415 = vpop.xlane.xlu0 %414
          %vm416 = vcmask 7168
          %417 = vst.msk [vmem:[#allocation2] sm:$0xff] %vm416, %v412
          %418 = vst.msk [vmem:[#allocation2 + $0x8] sm:$0xff] %vm416, %v415
          %419 = vst.msk [vmem:[#allocation3] sm:$0xff] %vm416, 1.0
          %420 = vst.msk [vmem:[#allocation3 + $0x8] sm:$0xff] %vm416, 1.0
          %v421 = vlaneseq
          %v422 = vshrl.u32 %v421, 7
          %v423 = vsub.s32 0, %v422
          %v424 = vrot.slane %v400, %v423
          %425 = vst.msk [vmem:[#allocation4] sm:$0xff] %vm409, %v424
          %426 = vst.msk [vmem:[#allocation4 + $0x8] sm:$0xff] %vm409, %v424
        $region64: #{tpu_custom_call.1} parent=43 // pred_fallthru
          _
        %v427 = vld [vmem:[%s340] sm:$0xf]
        %v428 = vld [vmem:[%s340 + $0x4] sm:$0xf]
        %v429 = vld [vmem:[%s349] sm:$0xf]
        %v430 = vld [vmem:[%s349 + $0x4] sm:$0xf]
        %vm431 = vcmask 130048
        %v433 = vsel %vm431, %v393, 0
        %v436 = vsel %vm431, %v427, 0
        %438 = vmatprep.subr.bf16.mxu0 0
        %439 = vmatpush1.bf16.xpose.msra.mxu0 %v436
        %440 = vmatprep.subr.bf16.mxu0 0
        %441 = vmatpush1.bf16.xpose.msra.mxu0 0
        %442 = vmatprep.subr.bf16.mxu0 0
        %443 = vmatpush1.bf16.xpose.msra.mxu0 0
        %444 = vmatprep.subr.bf16.mxu0 0
        %445 = vmatpush1.bf16.xpose.msra.mxu0 0
        %446 = vmatprep.subr.bf16.mxu0 0
        %447 = vmatpush1.bf16.xpose.msra.mxu0 0
        %448 = vmatprep.subr.bf16.mxu0 0
        %449 = vmatpush1.bf16.xpose.msra.mxu0 0
        %450 = vmatprep.subr.bf16.mxu0 0
        %451 = vmatpush1.bf16.xpose.msra.mxu0 0
        %452 = vmatprep.subr.bf16.mxu0 0
        %453 = vmatpush1.bf16.xpose.msra.mxu0 0
        %454 = vmatprep.subr.bf16.mxu0 0
        %455 = vmatpush1.bf16.xpose.msra.mxu0 0
        %456 = vmatprep.subr.bf16.mxu0 0
        %457 = vmatpush1.bf16.xpose.msra.mxu0 0
        %458 = vmatprep.subr.bf16.mxu0 0
        %459 = vmatpush1.bf16.xpose.msra.mxu0 0
        %460 = vmatprep.subr.bf16.mxu0 0
        %461 = vmatpush1.bf16.xpose.msra.mxu0 0
        %462 = vmatprep.subr.bf16.mxu0 0
        %463 = vmatpush1.bf16.xpose.msra.mxu0 0
        %464 = vmatprep.subr.bf16.mxu0 0
        %465 = vmatpush1.bf16.xpose.msra.mxu0 0
        %466 = vmatprep.subr.bf16.mxu0 0
        %467 = vmatpush1.bf16.xpose.msra.mxu0 0
        %468 = vmatprep.subr.bf16.mxu0 0
        %469 = vmatpush1.bf16.xpose.msra.mxu0 0
        %470 = vmatprep.mubr.bf16.mxu0 0
        %471 = vmatmul.mubr.bf16.gmra.mrb[0].mxu0 %v433
        %v472 = vpop.f32.mrb[0].mxu0
        %v473 = vadd.f32 0.0, %v472
        %v474 = vpop.f32.mrb[0].mxu0
        %v475 = vpop.f32.mrb[0].mxu0
        %v476 = vpop.f32.mrb[0].mxu0
        %477 = vdwg.mxu0
        %v479 = vsel %vm431, %v394, 0
        %v482 = vsel %vm431, %v428, 0
        %484 = vmatprep.subr.bf16.mxu0 0
        %485 = vmatpush1.bf16.xpose.msra.mxu0 %v482
        %486 = vmatprep.subr.bf16.mxu0 0
        %487 = vmatpush1.bf16.xpose.msra.mxu0 0
        %488 = vmatprep.subr.bf16.mxu0 0
        %489 = vmatpush1.bf16.xpose.msra.mxu0 0
        %490 = vmatprep.subr.bf16.mxu0 0
        %491 = vmatpush1.bf16.xpose.msra.mxu0 0
        %492 = vmatprep.subr.bf16.mxu0 0
        %493 = vmatpush1.bf16.xpose.msra.mxu0 0
        %494 = vmatprep.subr.bf16.mxu0 0
        %495 = vmatpush1.bf16.xpose.msra.mxu0 0
        %496 = vmatprep.subr.bf16.mxu0 0
        %497 = vmatpush1.bf16.xpose.msra.mxu0 0
        %498 = vmatprep.subr.bf16.mxu0 0
        %499 = vmatpush1.bf16.xpose.msra.mxu0 0
        %500 = vmatprep.subr.bf16.mxu0 0
        %501 = vmatpush1.bf16.xpose.msra.mxu0 0
        %502 = vmatprep.subr.bf16.mxu0 0
        %503 = vmatpush1.bf16.xpose.msra.mxu0 0
        %504 = vmatprep.subr.bf16.mxu0 0
        %505 = vmatpush1.bf16.xpose.msra.mxu0 0
        %506 = vmatprep.subr.bf16.mxu0 0
        %507 = vmatpush1.bf16.xpose.msra.mxu0 0
        %508 = vmatprep.subr.bf16.mxu0 0
        %509 = vmatpush1.bf16.xpose.msra.mxu0 0
        %510 = vmatprep.subr.bf16.mxu0 0
        %511 = vmatpush1.bf16.xpose.msra.mxu0 0
        %512 = vmatprep.subr.bf16.mxu0 0
        %513 = vmatpush1.bf16.xpose.msra.mxu0 0
        %514 = vmatprep.subr.bf16.mxu0 0
        %515 = vmatpush1.bf16.xpose.msra.mxu0 0
        %516 = vmatprep.mubr.bf16.mxu0 0
        %517 = vmatmul.mubr.bf16.gmra.mrb[0].mxu0 %v479
        %v518 = vpop.f32.mrb[0].mxu0
        %v519 = vadd.f32 0.0, %v518
        %v520 = vpop.f32.mrb[0].mxu0
        %v521 = vpop.f32.mrb[0].mxu0
        %v522 = vpop.f32.mrb[0].mxu0
        %523 = vdwg.mxu0
        %v524 = vld [vmem:[#allocation2] sm:$0xff]
        %v525 = vld [vmem:[#allocation2 + $0x8] sm:$0xff]
        %vm526 = vcmask 64512
        %v527 = vsel %vm526, %v473, -inf
        %528 = vmax.xlane.f32.xlu0 %v527
        %v529 = vpop.xlane.xlu0 %528
        %v530 = vsel %vm526, %v519, -inf
        %531 = vmax.xlane.f32.xlu0 %v530
        %v532 = vpop.xlane.xlu0 %531
        %v533 = vmax.f32 %v524, %v529
        %v534 = vmax.f32 %v525, %v532
        %v535 = vsub.f32 %v524, %v533
        %v536 = vsub.f32 %v525, %v534
        %v537 = vmul.f32 %v535, 1.442695
        %v538 = vpow.pop %v537
        %v539 = vmul.f32 %v536, 1.442695
        %v540 = vpow.pop %v539
        %542 = vset.pattern.permute.xlu0 0
        %543 = vperm.xlu0 %542, %v533
        %v544 = vpop.permute.xlu0 %543
        %547 = vset.pattern.permute.xlu0 0
        %548 = vperm.xlu0 %547, %v534
        %v549 = vpop.permute.xlu0 %548
        %v551 = vsub.f32 %v473, %v544
        %v552 = vsub.f32 %v519, %v549
        %v553 = vmul.f32 %v551, 1.442695
        %v554 = vpow.pop %v553
        %v555 = vmul.f32 %v552, 1.442695
        %v556 = vpow.pop %v555
        %v557 = vld [vmem:[#allocation3] sm:$0xff]
        %v558 = vld [vmem:[#allocation3 + $0x8] sm:$0xff]
        %v559 = vmul.f32 %v538, %v557
        %v560 = vmul.f32 %v540, %v558
        %v561 = vsel %vm526, %v554, 0.0
        %562 = vadd.xlane.f32.xlu0 %v561
        %v563 = vpop.xlane.xlu0 %562
        %v564 = vsel %vm526, %v556, 0.0
        %565 = vadd.xlane.f32.xlu0 %v564
        %v566 = vpop.xlane.xlu0 %565
        %v567 = vadd.f32 %v559, %v563
        %v568 = vadd.f32 %v560, %v566
        %vm569 = vcmask 7168
        %570 = vst.msk [vmem:[#allocation3] sm:$0xff] %vm569, %v567
        %571 = vst.msk [vmem:[#allocation3 + $0x8] sm:$0xff] %vm569, %v568
        %v572 = vld [vmem:[#allocation4] sm:$0xff]
        %v573 = vld [vmem:[#allocation4 + $0x8] sm:$0xff]
        %575 = vset.pattern.permute.xlu0 0
        %576 = vperm.xlu0 %575, %v538
        %v577 = vpop.permute.xlu0 %576
        %580 = vset.pattern.permute.xlu0 0
        %581 = vperm.xlu0 %580, %v540
        %v582 = vpop.permute.xlu0 %581
        %v584 = vmul.f32 %v577, %v572
        %v585 = vmul.f32 %v582, %v573
        %v586 = vpack.c.bf16 %v554, %v554
        %v587 = vpack.c.bf16 %v556, %v556
        %v589 = vsel %vm526, %v586, 0
        %vm591 = vcmask 1043456
        %v593 = vsel %vm591, %v429, 0
        %595 = vmatprep.subr.bf16.mxu0 0
        %596 = vmatpush1.bf16.msra.mxu0 %v593
        %597 = vmatprep.subr.bf16.mxu0 0
        %598 = vmatpush1.bf16.msra.mxu0 0
        %599 = vmatprep.subr.bf16.mxu0 0
        %600 = vmatpush1.bf16.msra.mxu0 0
        %601 = vmatprep.subr.bf16.mxu0 0
        %602 = vmatpush1.bf16.msra.mxu0 0
        %603 = vmatprep.subr.bf16.mxu0 0
        %604 = vmatpush1.bf16.msra.mxu0 0
        %605 = vmatprep.subr.bf16.mxu0 0
        %606 = vmatpush1.bf16.msra.mxu0 0
        %607 = vmatprep.subr.bf16.mxu0 0
        %608 = vmatpush1.bf16.msra.mxu0 0
        %609 = vmatprep.subr.bf16.mxu0 0
        %610 = vmatpush1.bf16.msra.mxu0 0
        %611 = vmatprep.subr.bf16.mxu0 0
        %612 = vmatpush1.bf16.msra.mxu0 0
        %613 = vmatprep.subr.bf16.mxu0 0
        %614 = vmatpush1.bf16.msra.mxu0 0
        %615 = vmatprep.subr.bf16.mxu0 0
        %616 = vmatpush1.bf16.msra.mxu0 0
        %617 = vmatprep.subr.bf16.mxu0 0
        %618 = vmatpush1.bf16.msra.mxu0 0
        %619 = vmatprep.subr.bf16.mxu0 0
        %620 = vmatpush1.bf16.msra.mxu0 0
        %621 = vmatprep.subr.bf16.mxu0 0
        %622 = vmatpush1.bf16.msra.mxu0 0
        %623 = vmatprep.subr.bf16.mxu0 0
        %624 = vmatpush1.bf16.msra.mxu0 0
        %625 = vmatprep.subr.bf16.mxu0 0
        %626 = vmatpush1.bf16.msra.mxu0 0
        %627 = vmatprep.mubr.bf16.mxu0 0
        %628 = vmatmul.mubr.bf16.gmra.mrb[0].mxu0 %v589
        %v629 = vpop.f32.mrb[0].mxu0
        %v630 = vadd.f32 0.0, %v629
        %v631 = vpop.f32.mrb[0].mxu0
        %v632 = vpop.f32.mrb[0].mxu0
        %v633 = vpop.f32.mrb[0].mxu0
        %634 = vdwg.mxu0
        %v636 = vsel %vm526, %v587, 0
        %v639 = vsel %vm591, %v430, 0
        %641 = vmatprep.subr.bf16.mxu0 0
        %642 = vmatpush1.bf16.msra.mxu0 %v639
        %643 = vmatprep.subr.bf16.mxu0 0
        %644 = vmatpush1.bf16.msra.mxu0 0
        %645 = vmatprep.subr.bf16.mxu0 0
        %646 = vmatpush1.bf16.msra.mxu0 0
        %647 = vmatprep.subr.bf16.mxu0 0
        %648 = vmatpush1.bf16.msra.mxu0 0
        %649 = vmatprep.subr.bf16.mxu0 0
        %650 = vmatpush1.bf16.msra.mxu0 0
        %651 = vmatprep.subr.bf16.mxu0 0
        %652 = vmatpush1.bf16.msra.mxu0 0
        %653 = vmatprep.subr.bf16.mxu0 0
        %654 = vmatpush1.bf16.msra.mxu0 0
        %655 = vmatprep.subr.bf16.mxu0 0
        %656 = vmatpush1.bf16.msra.mxu0 0
        %657 = vmatprep.subr.bf16.mxu0 0
        %658 = vmatpush1.bf16.msra.mxu0 0
        %659 = vmatprep.subr.bf16.mxu0 0
        %660 = vmatpush1.bf16.msra.mxu0 0
        %661 = vmatprep.subr.bf16.mxu0 0
        %662 = vmatpush1.bf16.msra.mxu0 0
        %663 = vmatprep.subr.bf16.mxu0 0
        %664 = vmatpush1.bf16.msra.mxu0 0
        %665 = vmatprep.subr.bf16.mxu0 0
        %666 = vmatpush1.bf16.msra.mxu0 0
        %667 = vmatprep.subr.bf16.mxu0 0
        %668 = vmatpush1.bf16.msra.mxu0 0
        %669 = vmatprep.subr.bf16.mxu0 0
        %670 = vmatpush1.bf16.msra.mxu0 0
        %671 = vmatprep.subr.bf16.mxu0 0
        %672 = vmatpush1.bf16.msra.mxu0 0
        %673 = vmatprep.mubr.bf16.mxu0 0
        %674 = vmatmul.mubr.bf16.gmra.mrb[0].mxu0 %v636
        %v675 = vpop.f32.mrb[0].mxu0
        %v676 = vadd.f32 0.0, %v675
        %v677 = vpop.f32.mrb[0].mxu0
        %v678 = vpop.f32.mrb[0].mxu0
        %v679 = vpop.f32.mrb[0].mxu0
        %680 = vdwg.mxu0
        %v681 = vadd.f32 %v584, %v630
        %v682 = vadd.f32 %v585, %v676
        %683 = vst.msk [vmem:[#allocation4] sm:$0xff] %vm431, %v681
        %684 = vst.msk [vmem:[#allocation4 + $0x8] sm:$0xff] %vm431, %v682
        %685 = vst.msk [vmem:[#allocation2] sm:$0xff] %vm569, %v533
        %686 = vst.msk [vmem:[#allocation2 + $0x8] sm:$0xff] %vm569, %v534
        // Predicated region
        $region65: #{tpu_custom_call.1} parent=43 // pred_check
          %p687 = pneg %p395
        $region66: #{tpu_custom_call.1} parent=43 // pred_check_branch
          %689 = sbr.rel (%p687) target = $region68
        $region67: #{tpu_custom_call.1} parent=43 // pred_region
          %v690 = vld [vmem:[#allocation3] sm:$0xff]
          %v691 = vld [vmem:[#allocation3 + $0x8] sm:$0xff]
          %v692 = vrcp.pop %v690
          %v693 = vrcp.pop %v691
          %v694 = vld [vmem:[#allocation4] sm:$0xff]
          %v695 = vld [vmem:[#allocation4 + $0x8] sm:$0xff]
          %697 = vset.pattern.permute.xlu0 0
          %698 = vperm.xlu0 %697, %v692
          %v699 = vpop.permute.xlu0 %698
          %702 = vset.pattern.permute.xlu0 0
          %703 = vperm.xlu0 %702, %v693
          %v704 = vpop.permute.xlu0 %703
          %v706 = vmul.f32 %v694, %v699
          %v707 = vmul.f32 %v695, %v704
          %709 = vrot.lane.b32.xlu0 %v707, 16
          %v710 = vpop.permute.xlu0 %709
          %v712 = vsel %vm431, %v706, %v710
          %v713 = vpack.c.bf16 %v712, %v712
          %v714 = vld [vmem:[#allocation11] sm:$0xf]
          %v715 = vld [vmem:[#allocation11 + $0x4] sm:$0xf]
          %v716 = vld [vmem:[#allocation11 + $0x8] sm:$0xf]
          %v717 = vld [vmem:[#allocation11 + $0xc] sm:$0xf]
          %v722 = vunpack.c.l.b16 %v714
          %v723 = vunpack.c.l.b16 %v715
          %v724 = vunpack.c.l.b16 %v716
          %v725 = vunpack.c.l.b16 %v717
          %v726 = vpack.c.b16 %v723, %v722
          %v727 = vpack.c.b16 %v725, %v724
          %vm730 = vcmask 261120
          %v732 = vsel %vm730, %v713, 0
          %734 = vmatprep.subr.bf16.mxu0 0
          %735 = vmatpush1.bf16.msra.mxu0 %v726
          %736 = vmatprep.subr.bf16.mxu0 0
          %737 = vmatpush1.bf16.msra.mxu0 %v727
          %738 = vmatprep.subr.bf16.mxu0 0
          %739 = vmatpush1.bf16.msra.mxu0 0
          %740 = vmatprep.subr.bf16.mxu0 0
          %741 = vmatpush1.bf16.msra.mxu0 0
          %742 = vmatprep.subr.bf16.mxu0 0
          %743 = vmatpush1.bf16.msra.mxu0 0
          %744 = vmatprep.subr.bf16.mxu0 0
          %745 = vmatpush1.bf16.msra.mxu0 0
          %746 = vmatprep.subr.bf16.mxu0 0
          %747 = vmatpush1.bf16.msra.mxu0 0
          %748 = vmatprep.subr.bf16.mxu0 0
          %749 = vmatpush1.bf16.msra.mxu0 0
          %750 = vmatprep.subr.bf16.mxu0 0
          %751 = vmatpush1.bf16.msra.mxu0 0
          %752 = vmatprep.subr.bf16.mxu0 0
          %753 = vmatpush1.bf16.msra.mxu0 0
          %754 = vmatprep.subr.bf16.mxu0 0
          %755 = vmatpush1.bf16.msra.mxu0 0
          %756 = vmatprep.subr.bf16.mxu0 0
          %757 = vmatpush1.bf16.msra.mxu0 0
          %758 = vmatprep.subr.bf16.mxu0 0
          %759 = vmatpush1.bf16.msra.mxu0 0
          %760 = vmatprep.subr.bf16.mxu0 0
          %761 = vmatpush1.bf16.msra.mxu0 0
          %762 = vmatprep.subr.bf16.mxu0 0
          %763 = vmatpush1.bf16.msra.mxu0 0
          %764 = vmatprep.subr.bf16.mxu0 0
          %765 = vmatpush1.bf16.msra.mxu0 0
          %766 = vmatprep.mubr.bf16.mxu0 0
          %767 = vmatmul.mubr.bf16.gmra.mrb[0].mxu0 %v732
          %v768 = vpop.f32.mrb[0].mxu0
          %v769 = vadd.f32 0.0, %v768
          %v770 = vpop.f32.mrb[0].mxu0
          %v771 = vpop.f32.mrb[0].mxu0
          %v772 = vpop.f32.mrb[0].mxu0
          %773 = vdwg.mxu0
          %774 = vadd.xlane.f32.xlu0 %v769
          %v775 = vpop.xlane.xlu0 %774
          %v776 = vmul.f32 %v775, 0.03125
          %v777 = vmul.f32 %v769, %v769
          %778 = vadd.xlane.f32.xlu0 %v777
          %v779 = vpop.xlane.xlu0 %778
          %v780 = vmul.f32 %v779, 0.03125
          %v781 = vmul.f32 %v776, %v776
          %v782 = vsub.f32 %v780, %v781
          %v783 = vsub.f32 %v769, %v776
          %v784 = vadd.f32 %v782, 1e-05
          %v785 = vrsqrt.pop %v784
          %v786 = vmul.f32 %v783, %v785
          %v787 = vld [vmem:[%s5] sm:$0x1]
          %v789 = vlaneseq
          %v790 = vshrl.u32 %v789, 7
          %v791 = vsub.s32 0, %v790
          %v792 = vrot.slane %v787, %v791
          %v794 = vmul.f32 %v786, %v792
          %795 = vst [vmem:[%s391] sm:$0xff] %v794
        $region68: #{tpu_custom_call.1} parent=43 // pred_fallthru
          _
        %s796 = sand.u32 %s203, 1
        %s797 = scalar_lea.sflag [#allocation7], %s796
        %s798 = sand.u32 %s203, 1
        %s799 = smul.addr %s798, 8
        %s800 = scalar_lea.vmem [#allocation13], %s799
        // Predicated region
        $region69: #{tpu_custom_call.1} parent=43 // pred_check
          %p801 = pneg %p213
        $region70: #{tpu_custom_call.1} parent=43 // pred_check_branch
          %803 = sbr.rel (%p801) target = $region72
        $region71: #{tpu_custom_call.1} parent=43 // pred_region
          %s805 = ssub.s32 128, 128
          %806 = vsyncadd %s797, %s805
          %s807 = sadd.s32 %s33, %s32
          %s808 = smul.addr %s807, 128
          %s809 = scalar_lea.hbm %s6, %s808
          %s811 = sshll.u32 %s800, 4
          %s812 = int_to_ptr.vmem [resolvable:$true] %s811
          %814 = dma.vmem_to_hbm [thread:$0]  %s812, 128, %s809, %s797
        $region72: #{tpu_custom_call.1} parent=43 // pred_fallthru
          _
      $region44: #{tpu_custom_call.1} parent=5 // pred_fallthru
        _
      %p815 = scmp.le.s32.totalorder 2, %s22
      // Predicated region
      $region73: #{tpu_custom_call.1} parent=5 // pred_check
        %p816 = pneg %p815
      $region74: #{tpu_custom_call.1} parent=5 // pred_check_branch
        %818 = sbr.rel (%p816) target = $region76
      $region75: #{tpu_custom_call.1} parent=5 // pred_region
        %s819 = ssub.s32 %s22, 2
        // Predicated region
        $region77: #{tpu_custom_call.1} parent=75 // pred_check
          %p820 = pneg %p219
        $region78: #{tpu_custom_call.1} parent=75 // pred_check_branch
          %822 = sbr.rel (%p820) target = $region80
        $region79: #{tpu_custom_call.1} parent=75 // pred_region
          %s823 = sand.u32 %s204, 1
          %s824 = scalar_lea.sflag [#allocation7], %s823
          %s825 = sand.u32 %s204, 1
          %s826 = smul.addr %s825, 8
          %s827 = scalar_lea.vmem [#allocation13], %s826
          %828 = dma.done %s824, 128
        $region80: #{tpu_custom_call.1} parent=75 // pred_fallthru
          _
      $region76: #{tpu_custom_call.1} parent=5 // pred_fallthru
        _
    $region6: #{tpu_custom_call.1} parent=1 // loop_footer
      %s26 = sadd.s32 1, %s22
    $region7: #{tpu_custom_call.1} parent=1 // loop_footer_branch
      %21 = sbr.rel target = $region3
    $region8: #{tpu_custom_call.1} parent=1 // loop_exit
      _
    %829 = vsyncpa [#allocation6], 1
    %s830 = scalar_lea.sflag [#allocation6], 1
    %831 = vsyncpa %s830, 1
    %832 = vsyncpa [#allocation9], 1
    %s833 = scalar_lea.sflag [#allocation9], 1
    %834 = vsyncpa %s833, 1
    %835 = vsyncpa [#allocation12], 1
    %836 = vsyncpa [#allocation7], 1
    %s837 = scalar_lea.sflag [#allocation7], 1
    %838 = vsyncpa %s837, 1

</llo_original>
